<compile_context>
chip_gen: v7x
topology: tpu7x:2x2x1
jax: 0.10.0
libtpu: 0.0.40
codegen_flags: <defaults>
</compile_context>

<pallas_src>
import jax
import jax.numpy as jnp
from jax.experimental import pallas as pl
from jax.experimental.pallas import tpu as pltpu


# --------------------------------------------------------------------------
# Pallas kernel: single direct HBM->HBM DMA (used only when a materialized,
# separate output buffer is explicitly requested).
# --------------------------------------------------------------------------
def _dma_identity_kernel(w_hbm_ref, o_hbm_ref, sem):
    copy = pltpu.make_async_copy(w_hbm_ref, o_hbm_ref, sem)
    copy.start()
    copy.wait()


def _pallas_materialize(weight: jax.Array) -> jax.Array:
    nbytes = weight.size * weight.dtype.itemsize
    return pl.pallas_call(
        _dma_identity_kernel,
        out_shape=jax.ShapeDtypeStruct(weight.shape, weight.dtype),
        # Both operands stay in HBM; the kernel DMAs directly between them.
        # No grid -> no per-step overhead, no double-buffered VMEM, no masked
        # vst on the non-lane-aligned (155, 220) trailing dims.
        in_specs=[pl.BlockSpec(memory_space=pl.ANY)],
        out_specs=pl.BlockSpec(memory_space=pl.ANY),
        scratch_shapes=[pltpu.SemaphoreType.DMA(())],
        # Tell XLA this is a tiny mem-op so it can overlap/schedule it freely.
        cost_estimate=pl.CostEstimate(
            flops=0, transcendentals=0, bytes_accessed=2 * nbytes
        ),
    )(weight)


# Identity VJP so gradient-based optimization of the synthesized image still
# works even through the materializing Pallas path.
@jax.custom_vjp
def _pallas_identity(weight: jax.Array) -> jax.Array:
    return _pallas_materialize(weight)


def _pallas_identity_fwd(weight):
    return _pallas_materialize(weight), None


def _pallas_identity_bwd(_, g):
    return (g,)


_pallas_identity.defvjp(_pallas_identity_fwd, _pallas_identity_bwd)


# --------------------------------------------------------------------------
# Forward: by default just return the weight (the real optimization -- zero
# data movement, no custom-call barrier, trivially differentiable).
# --------------------------------------------------------------------------
def synthesized_image_forward(weight: jax.Array, *, materialize: bool = False) -> jax.Array:
    """Pallas/JAX equivalent of SynthesizedImage.forward()."""
    if materialize:
        # Explicitly requested fresh buffer -> single HBM->HBM DMA kernel.
        return _pallas_identity(weight)
    # forward() is a pure identity; returning the array lets XLA alias it.
    return weight


class SynthesizedImage:
    """JAX/Pallas port of the PyTorch SynthesizedImage module."""

    def __init__(self, init_img_tensor=None, img_shape=(1, 1, 155, 220), *, key=None):
        if init_img_tensor is not None:
            self.weight = jnp.asarray(init_img_tensor, dtype=jnp.float32)
        else:
            # torch.rand -> uniform [0, 1).
            if key is None:
                key = jax.random.PRNGKey(0)
            self.weight = jax.random.uniform(
                key, shape=img_shape, dtype=jnp.float32, minval=0.0, maxval=1.0
            )

    def forward(self, *, materialize: bool = False):
        return synthesized_image_forward(self.weight, materialize=materialize)

    __call__ = forward


if __name__ == "__main__":
    key = jax.random.PRNGKey(0)

    # Small shape consistent with the module's (N, C, H, W) image parameter.
    img_shape = (1, 1, 16, 32)

    # Case 1: init from a provided tensor (mirrors init_img_tensor path).
    init_img = jax.random.uniform(key, shape=img_shape, dtype=jnp.float32)
    module = SynthesizedImage(init_img_tensor=init_img, img_shape=img_shape)

    # Fast path (default): pure identity, no kernel.
    out_fast = jax.block_until_ready(module())
    assert out_fast.shape == img_shape and out_fast.dtype == jnp.float32
    assert jnp.array_equal(out_fast, init_img)

    # Pallas path: run the DMA kernel once and verify bit-exactness.
    out_mat = jax.block_until_ready(module(materialize=True))
    assert out_mat.shape == img_shape and out_mat.dtype == jnp.float32
    assert jnp.array_equal(out_mat, init_img), "forward() must return the weight exactly"

    # Differentiability: gradient of sum(forward()) w.r.t. the weight is ones,
    # through both the fast path and the Pallas (custom_vjp) path.
    g_fast = jax.grad(lambda w: jnp.sum(synthesized_image_forward(w)))(module.weight)
    g_mat = jax.grad(
        lambda w: jnp.sum(synthesized_image_forward(w, materialize=True))
    )(module.weight)
    assert jnp.array_equal(g_fast, jnp.ones_like(module.weight))
    assert jnp.array_equal(g_mat, jnp.ones_like(module.weight))

    # Case 2: random init path (init_img_tensor is None), default module shape.
    module2 = SynthesizedImage(init_img_tensor=None, img_shape=(1, 1, 155, 220), key=key)
    out2 = jax.block_until_ready(module2(materialize=True))
    assert out2.shape == (1, 1, 155, 220)
    assert jnp.array_equal(out2, module2.weight)

    print("KERNEL_OK")
</pallas_src>

<mosaic_0001>
module attributes {stable_mosaic.version = 11 : i64} {
  func.func @_dma_identity_kernel(%arg0: memref<1x1x16x32xf32, #tpu.memory_space<any>>, %arg1: memref<1x1x16x32xf32, #tpu.memory_space<any>>, %arg2: memref<!tpu.dma_semaphore, #tpu.memory_space<semaphore_mem>>) attributes {dimension_semantics = [], scalar_prefetch = 0 : i64, scratch_operands = 1 : i64, tpu.core_type = #tpu.core_type<tc>} {
    tpu.enqueue_dma source(%arg0 : memref<1x1x16x32xf32, #tpu.memory_space<any>>) target(%arg1 : memref<1x1x16x32xf32, #tpu.memory_space<any>>) target_semaphore(%arg2 : memref<!tpu.dma_semaphore, #tpu.memory_space<semaphore_mem>>)
    tpu.wait_dma2 semaphore(%arg2 : memref<!tpu.dma_semaphore, #tpu.memory_space<semaphore_mem>>) src(%arg0 : memref<1x1x16x32xf32, #tpu.memory_space<any>>) dst(%arg1 : memref<1x1x16x32xf32, #tpu.memory_space<any>>)
    return
  }
}

</mosaic_0001>

<llo_original>
// kernel: tpu_custom_call.1
$region0: #{tpu_custom_call.1}
  #allocation0 [shape = 'u32[]', space=smem, size = 0x4, offset = 0x4, fixed_abs, tag = 'smem constant byte address 0x4 - core index']
  #allocation1 [shape = 'u32[144,128]{1,0:T(1,128)}', space=vmem, size = 0x12000, scoped, tag = 'internal scratch']
  #allocation2 [shape = 's32[1]{0}', space=sflag, size = 0x4, scoped, tag = 'scratch operand']
  #allocation3 [shape = 's32[]', space=sflag, size = 0x4, offset = 0, fixed_abs, tag = 'sflag constant byte address 0x0 - dummy sync flag']
  #allocation4 [shape = 'u32[0]{0}', space=smem, size = 0, offset = 0, fixed_abs, tag = 'smem constant byte address 0x0 - null']
  %s0 = inlined_call_operand.hbm [shape: f32[1,1,16,32], index: 0, kind: input, shape index: {}]
  %s1 = inlined_call_operand.hbm [shape: f32[1,1,16,32], index: 1, kind: output, shape index: {}]
  %s2 = sld [smem:[#allocation0]]
  $region2: #{tpu_custom_call.1} parent=0
    _
  %s4 = ssub.s32 1, %s2
  %s5 = scalar_select 0, %s4, %s2
  %s7 = sshll.u32 1, 14
  %s8 = sxor.u32 4294967295, %s7
  %s11 = sshll.u32 3, 24
  %s12 = sxor.u32 4294967295, %s11
  %s13 = sand.u32 0, %s12
  %s15 = sor.u32 %s13, 0
  %18 = dma.general %s0, 256, %s1, [#allocation2], [#allocation3], [#allocation4], %s15, 0
  %s19 = smul.u32 1, 1
  %s20 = smul.u32 %s19, 16
  %s21 = smul.u32 %s20, 1
  %s22 = sshll.u32 %s21, 4
  %23 = dma.done [#allocation2], %s22
  %24 = vsyncmov [#allocation2]
  %s25 = vpop.sfrf %24
  %p26 = scmp.eq.s32.totalorder %s25, 0
  %p27 = pneg %p26
  %29 = shalt.err (%p27)

</llo_original>
